<compile_context>
chip_gen: v7x
topology: tpu7x:2x2x1
jax: 0.10.0
libtpu: 0.0.40
codegen_flags: <defaults>
</compile_context>

<pallas_src>
import jax
import jax.numpy as jnp
from jax.experimental import pallas as pl
from jax.experimental.pallas import tpu as pltpu

INPUT_SIZE = 10
OUTPUT_SIZE = 5
LANES = 128            # physical lane width: 10/5-wide f32 rows are 128-lane tiled
GRIDLESS_MAX_B = 1024  # whole problem fits comfortably in VMEM below this
MAX_BATCH_TILE = 2048  # rows per block for the tiled large-batch path
TILE_QUANTUM = 512     # tile granularity (multiple of 8 for f32 sublanes)


def linear_kernel(x_ref, w_ref, b_ref, o_ref):
    # x_ref: (tile_B, IN), w_ref: (IN, OUT), b_ref: (1, OUT), o_ref: (tile_B, OUT)
    # f32 accumulate on the MXU, bias add in f32, direct (B, 5) store.
    acc = jnp.dot(x_ref[...], w_ref[...], preferred_element_type=jnp.float32)
    o_ref[...] = (acc + b_ref[...]).astype(o_ref.dtype)


def _round_up(x, m):
    return ((x + m - 1) // m) * m


def _cost(batch):
    # Physical traffic: each x row (10 f32) and y row (5 f32) occupies one
    # 128-lane tiled row (512 B) in HBM/VMEM; W/b are negligible.
    row_bytes = 4 * LANES
    return pl.CostEstimate(
        flops=2 * batch * INPUT_SIZE * OUTPUT_SIZE,
        transcendentals=0,
        bytes_accessed=row_bytes * (batch            # x read
                                    + batch          # y write
                                    + INPUT_SIZE     # W read
                                    + 1),            # b read
    )


def small_model_forward(x, w_t, b):
    """x: (B, 10) f32; w_t: (10, 5) f32; b: (5,) f32 -> (B, 5) f32 (== x @ W.T + b in torch)."""
    B = x.shape[0]
    b2 = b.reshape(1, OUTPUT_SIZE)  # metadata-only reshape, no data movement

    if B <= GRIDLESS_MAX_B:
        # Gridless path: whole arrays as single VMEM-resident blocks.
        # No grid => no pipeline prologue/epilogue, no double-buffer DMA machinery.
        return pl.pallas_call(
            linear_kernel,
            out_shape=jax.ShapeDtypeStruct((B, OUTPUT_SIZE), x.dtype),
            in_specs=[
                pl.BlockSpec(memory_space=pltpu.MemorySpace.VMEM),
                pl.BlockSpec(memory_space=pltpu.MemorySpace.VMEM),
                pl.BlockSpec(memory_space=pltpu.MemorySpace.VMEM),
            ],
            out_specs=pl.BlockSpec(memory_space=pltpu.MemorySpace.VMEM),
            cost_estimate=_cost(B),
        )(x, w_t, b2)

    # Batch-tiled path: x/out tiled over batch, W/b resident (index_map -> (0, 0)).
    # Tile chosen so there are >= ~4 tiles (keeps both v7x TensorCores busy) but
    # capped at 2048 rows (~4-5 MiB/step incl. double buffering).
    tile = min(MAX_BATCH_TILE, _round_up(pl.cdiv(B, 4), TILE_QUANTUM))
    n_tiles = pl.cdiv(B, tile)
    return pl.pallas_call(
        linear_kernel,
        out_shape=jax.ShapeDtypeStruct((B, OUTPUT_SIZE), x.dtype),
        grid=(n_tiles,),
        in_specs=[
            pl.BlockSpec((tile, INPUT_SIZE), lambda i: (i, 0)),
            pl.BlockSpec((INPUT_SIZE, OUTPUT_SIZE), lambda i: (0, 0)),
            pl.BlockSpec((1, OUTPUT_SIZE), lambda i: (0, 0)),
        ],
        out_specs=pl.BlockSpec((tile, OUTPUT_SIZE), lambda i: (i, 0)),
        compiler_params=pltpu.CompilerParams(
            # "parallel": lets v7x's 2 TensorCores split the batch tiles.
            dimension_semantics=("parallel",),
        ),
        cost_estimate=_cost(B),
    )(x, w_t, b2)


def init_params(key):
    # Deterministic init mimicking torch.nn.Linear default:
    # U(-1/sqrt(in_features), 1/sqrt(in_features)) for both weight and bias.
    kw, kb = jax.random.split(key)
    bound = 1.0 / jnp.sqrt(jnp.float32(INPUT_SIZE))
    # PyTorch weight shape is (out, in); store transposed (in, out) for the kernel.
    w = jax.random.uniform(kw, (OUTPUT_SIZE, INPUT_SIZE), jnp.float32, -bound, bound)
    b = jax.random.uniform(kb, (OUTPUT_SIZE,), jnp.float32, -bound, bound)
    return w.T, b


if __name__ == "__main__":
    key = jax.random.PRNGKey(0)
    k_x, k_x2, k_p = jax.random.split(key, 3)

    w_t, b = init_params(k_p)

    # Small batch: gridless single-VMEM-block path.
    batch = 8
    x = jax.random.normal(k_x, (batch, INPUT_SIZE), jnp.float32)
    out = small_model_forward(x, w_t, b)
    jax.block_until_ready(out)
    ref = x @ w_t + b
    assert out.shape == (batch, OUTPUT_SIZE)
    assert jnp.allclose(out, ref, atol=1e-5, rtol=1e-5)

    # Larger batch (not a tile multiple): exercises the batch-tiled, megacore-parallel
    # path with a masked partial final block (no jnp.pad, no output trim).
    batch2 = 3000
    x2 = jax.random.normal(k_x2, (batch2, INPUT_SIZE), jnp.float32)
    out2 = small_model_forward(x2, w_t, b)
    jax.block_until_ready(out2)
    ref2 = x2 @ w_t + b
    assert out2.shape == (batch2, OUTPUT_SIZE)
    assert jnp.allclose(out2, ref2, atol=1e-5, rtol=1e-5)

    print("KERNEL_OK")
</pallas_src>

<mosaic_0001>
module attributes {stable_mosaic.version = 11 : i64} {
  func.func @linear_kernel(%arg0: memref<8x10xf32, #tpu.memory_space<vmem>>, %arg1: memref<10x5xf32, #tpu.memory_space<vmem>>, %arg2: memref<1x5xf32, #tpu.memory_space<vmem>>, %arg3: memref<8x5xf32, #tpu.memory_space<vmem>>) attributes {dimension_semantics = [], scalar_prefetch = 0 : i64, scratch_operands = 0 : i64, tpu.core_type = #tpu.core_type<tc>} {
    %c0 = arith.constant 0 : index
    %c0_0 = arith.constant 0 : index
    %0 = vector.load %arg0[%c0, %c0_0] : memref<8x10xf32, #tpu.memory_space<vmem>>, vector<8x10xf32>
    %c0_1 = arith.constant 0 : index
    %c0_2 = arith.constant 0 : index
    %1 = vector.load %arg1[%c0_1, %c0_2] : memref<10x5xf32, #tpu.memory_space<vmem>>, vector<10x5xf32>
    %cst = arith.constant dense<0.000000e+00> : vector<8x5xf32>
    %2 = tpu.matmul %0, %1, %cst {dimension_numbers = #tpu.dot_dimension_numbers<[1], [0], [0], [1], [0, 0, 1, 1], [], []>} : vector<8x10xf32>, vector<10x5xf32>, vector<8x5xf32> -> vector<8x5xf32>
    %c0_3 = arith.constant 0 : index
    %c0_4 = arith.constant 0 : index
    %3 = vector.load %arg2[%c0_3, %c0_4] : memref<1x5xf32, #tpu.memory_space<vmem>>, vector<1x5xf32>
    %4 = vector.broadcast %3 : vector<1x5xf32> to vector<8x5xf32>
    %5 = arith.addf %2, %4 : vector<8x5xf32>
    %c0_5 = arith.constant 0 : index
    %c0_6 = arith.constant 0 : index
    %6 = vector.load %arg3[%c0_5, %c0_6] : memref<8x5xf32, #tpu.memory_space<vmem>>, vector<8x5xf32>
    tpu.vector_store %arg3[%c0_5, %c0_6], %5 {strides = array<i32>} : memref<8x5xf32, #tpu.memory_space<vmem>>, vector<8x5xf32>,
    return
  }
}

</mosaic_0001>

<llo_original>
// kernel: tpu_custom_call.1
$region0: #{tpu_custom_call.1}
  #allocation0 [shape = 'u32[]', space=smem, size = 0x4, offset = 0x4, fixed_abs, tag = 'smem constant byte address 0x4 - core index']
  #allocation1 [shape = 'u32[144,128]{1,0:T(1,128)}', space=vmem, size = 0x12000, scoped, tag = 'internal scratch']
  %s0 = inlined_call_operand.vmem [shape: f32[8,10], index: 0, kind: input, shape index: {}]
  %s1 = inlined_call_operand.vmem [shape: f32[10,5], index: 1, kind: input, shape index: {}]
  %s2 = inlined_call_operand.vmem [shape: f32[1,5], index: 2, kind: input, shape index: {}]
  %s3 = inlined_call_operand.hbm [shape: f32[8,5], index: 3, kind: output, shape index: {}]
  %s4 = sld [smem:[#allocation0]]
  $region22: #{tpu_custom_call.1} parent=0
    _
  %s6 = ssub.s32 1, %s4
  %s7 = scalar_select 0, %s6, %s4
  $region1: #{tpu_custom_call.1} parent=0
    #allocation2 [shape = 'u8[4096]{0}', space=vmem, size = 0x1000, scoped, tag = 'output window, operand 0, single buffered']
    #allocation3 [shape = 's32[1]{0}', space=sflag, size = 0x4, scoped, tag = 'scoped memory for tpu_custom_call.1']
    %8 = vsyncpa [#allocation3], 0
    // Predicated region
    $region2: #{tpu_custom_call.1} parent=1 // pred_check
      _
    $region3: #{tpu_custom_call.1} parent=1 // pred_check_branch
      %10 = sbr.rel (0) target = $region5
    $region4: #{tpu_custom_call.1} parent=1 // pred_region
      _
    $region5: #{tpu_custom_call.1} parent=1 // pred_fallthru
      _
    // Predicated region
    $region6: #{tpu_custom_call.1} parent=1 // pred_check
      _
    $region7: #{tpu_custom_call.1} parent=1 // pred_check_branch
      %12 = sbr.rel (0) target = $region9
    $region8: #{tpu_custom_call.1} parent=1 // pred_region
      _
    $region9: #{tpu_custom_call.1} parent=1 // pred_fallthru
      _
    // Predicated region
    $region10: #{tpu_custom_call.1} parent=1 // pred_check
      _
    $region11: #{tpu_custom_call.1} parent=1 // pred_check_branch
      %14 = sbr.rel (0) target = $region13
    $region12: #{tpu_custom_call.1} parent=1 // pred_region
      _
    $region13: #{tpu_custom_call.1} parent=1 // pred_fallthru
      _
    %v15 = vld [vmem:[%s0] sm:$0xff]
    %v16 = vld [vmem:[%s1] sm:$0xff]
    %v17 = vld [vmem:[%s1 + $0x8] sm:$0x3]
    %v18 = vld [vmem:[%s2] sm:$0x1]
    %v20 = vlaneseq
    %v21 = vshrl.u32 %v20, 7
    %v22 = vsub.s32 0, %v21
    %v23 = vrot.slane %v18, %v22
    %vm25 = vcmask 80896
    %v27 = vsel %vm25, %v15, 0
    %vm29 = vcmask 1041408
    %v31 = vsel %vm29, %v17, 0
    %33 = vmatprep.subr.mxu0 0.0
    %34 = vmatpush1.msra.mxu0 %v16
    %35 = vmatprep.subr.mxu0 0.0
    %36 = vmatpush1.msra.mxu0 %v31
    %37 = vmatprep.subr.mxu0 0.0
    %38 = vmatpush1.msra.mxu0 0.0
    %39 = vmatprep.subr.mxu0 0.0
    %40 = vmatpush1.msra.mxu0 0.0
    %41 = vmatprep.subr.mxu0 0.0
    %42 = vmatpush1.msra.mxu0 0.0
    %43 = vmatprep.subr.mxu0 0.0
    %44 = vmatpush1.msra.mxu0 0.0
    %45 = vmatprep.subr.mxu0 0.0
    %46 = vmatpush1.msra.mxu0 0.0
    %47 = vmatprep.subr.mxu0 0.0
    %48 = vmatpush1.msra.mxu0 0.0
    %49 = vmatprep.subr.mxu0 0.0
    %50 = vmatpush1.msra.mxu0 0.0
    %51 = vmatprep.subr.mxu0 0.0
    %52 = vmatpush1.msra.mxu0 0.0
    %53 = vmatprep.subr.mxu0 0.0
    %54 = vmatpush1.msra.mxu0 0.0
    %55 = vmatprep.subr.mxu0 0.0
    %56 = vmatpush1.msra.mxu0 0.0
    %57 = vmatprep.subr.mxu0 0.0
    %58 = vmatpush1.msra.mxu0 0.0
    %59 = vmatprep.subr.mxu0 0.0
    %60 = vmatpush1.msra.mxu0 0.0
    %61 = vmatprep.subr.mxu0 0.0
    %62 = vmatpush1.msra.mxu0 0.0
    %63 = vmatprep.subr.mxu0 0.0
    %64 = vmatpush1.msra.mxu0 0.0
    %65 = vmatprep.subr.mxu0 0.0
    %66 = vmatpush1.msra.mxu0 0.0
    %67 = vmatprep.subr.mxu0 0.0
    %68 = vmatpush1.msra.mxu0 0.0
    %69 = vmatprep.subr.mxu0 0.0
    %70 = vmatpush1.msra.mxu0 0.0
    %71 = vmatprep.subr.mxu0 0.0
    %72 = vmatpush1.msra.mxu0 0.0
    %73 = vmatprep.subr.mxu0 0.0
    %74 = vmatpush1.msra.mxu0 0.0
    %75 = vmatprep.subr.mxu0 0.0
    %76 = vmatpush1.msra.mxu0 0.0
    %77 = vmatprep.subr.mxu0 0.0
    %78 = vmatpush1.msra.mxu0 0.0
    %79 = vmatprep.subr.mxu0 0.0
    %80 = vmatpush1.msra.mxu0 0.0
    %81 = vmatprep.subr.mxu0 0.0
    %82 = vmatpush1.msra.mxu0 0.0
    %83 = vmatprep.subr.mxu0 0.0
    %84 = vmatpush1.msra.mxu0 0.0
    %85 = vmatprep.subr.mxu0 0.0
    %86 = vmatpush1.msra.mxu0 0.0
    %87 = vmatprep.subr.mxu0 0.0
    %88 = vmatpush1.msra.mxu0 0.0
    %89 = vmatprep.subr.mxu0 0.0
    %90 = vmatpush1.msra.mxu0 0.0
    %91 = vmatprep.subr.mxu0 0.0
    %92 = vmatpush1.msra.mxu0 0.0
    %93 = vmatprep.subr.mxu0 0.0
    %94 = vmatpush1.msra.mxu0 0.0
    %95 = vmatprep.subr.mxu0 0.0
    %96 = vmatpush1.msra.mxu0 0.0
    %97 = vmatprep.mubr.f32.mxu0 0.0
    %98 = vmatmul.mubr.f32.gmra.mrb[0].mxu0 %v27
    %v99 = vpop.f32.mrb[0].mxu0
    %v100 = vadd.f32 %v23, %v99
    %v101 = vpop.f32.mrb[0].mxu0
    %102 = vdwg.mxu0
    %vm103 = vcmask 39936
    %104 = vst.msk [vmem:[#allocation2] sm:$0xff] %vm103, %v100
    // Predicated region
    $region14: #{tpu_custom_call.1} parent=1 // pred_check
      _
    $region15: #{tpu_custom_call.1} parent=1 // pred_check_branch
      %106 = sbr.rel (0) target = $region17
    $region16: #{tpu_custom_call.1} parent=1 // pred_region
      %s108 = ssub.s32 128, 128
      %109 = vsyncadd [#allocation3], %s108
      %s111 = sshll.u32 [#allocation2], 4
      %s112 = int_to_ptr.vmem [resolvable:$true] %s111
      %114 = dma.vmem_to_hbm [thread:$0]  %s112, 128, %s3, [#allocation3]
    $region17: #{tpu_custom_call.1} parent=1 // pred_fallthru
      _
    // Predicated region
    $region18: #{tpu_custom_call.1} parent=1 // pred_check
      _
    $region19: #{tpu_custom_call.1} parent=1 // pred_check_branch
      %116 = sbr.rel (0) target = $region21
    $region20: #{tpu_custom_call.1} parent=1 // pred_region
      %117 = dma.done [#allocation3], 128
    $region21: #{tpu_custom_call.1} parent=1 // pred_fallthru
      _
    %118 = vsyncpa [#allocation3], 1

</llo_original>
